<compile_context>
chip_gen: v6e
topology: v6e:2x2x1
jax: 0.10.0
libtpu: 0.0.40
codegen_flags: <defaults>
</compile_context>

<pallas_src>
import math

import jax
import jax.numpy as jnp
from jax.experimental import pallas as pl
from jax.experimental.pallas import tpu as pltpu

TIMESERIES = 5   # conv in_channels
FEATURE = 7      # conv kernel width (spans full feature dim -> W_out = 1)
OUT_CH = 32      # conv out_channels

_SUBLANE = 16                      # bf16-friendly batch-tile granularity
_VMEM_BUDGET = 40 << 20            # working-set budget (v7x phys VMEM is 64 MiB/core)


def _round_up(x, m):
    return ((x + m - 1) // m) * m


def _cdiv(a, b):
    return -(-a // b)


def _vmem_bytes(tb, k, n):
    """Rough per-core VMEM working set of one grid step (double-buffered)."""
    return (2 * tb * k * 2            # bf16 activation tile, 2 buffers
            + 2 * k * n * 2           # bf16 block-diagonal weight, 2 buffers
            + tb * n * 4              # f32 conv/ReLU intermediate
            + 2 * 8 * _round_up(n, 128) * 4     # padded (2, n) bias/fc operand
            + 2 * 8 * _round_up(tb, 128) * 4)   # padded (1, 1, tb) output block


def prepare_critic_params(conv_w, conv_b, fc_w, fc_b, movement):
    """Pure function of the module weights and movement count.

    Call ONCE per weight update and reuse across forward calls — materializing
    the (mostly-zero) block-diagonal weight per call would cost more than the
    Pallas kernel's own activation traffic at small batch sizes.
    """
    del fc_b  # applied in the wrapper, not inside the kernel
    m = int(movement)
    c, t, _, f = conv_w.shape
    wc = jnp.transpose(conv_w[:, :, 0, :].astype(jnp.float32), (1, 2, 0))   # (T, F, C)
    # Block-diagonal conv weight: Wbig[(t,m,f), (m',c)] = wc[t,f,c] * (m == m')
    # built with a broadcast-multiply against a unit diagonal (no einsum).
    eye = jnp.eye(m, dtype=jnp.float32)
    wbig = (wc[:, None, :, None, :] * eye[None, :, None, :, None]).reshape(t * m * f, m * c)
    wbig = wbig.astype(jnp.bfloat16)                                         # streamed MXU operand
    bct = jnp.tile(conv_b.astype(jnp.float32), m)                            # (M*C,) conv bias per (m, c)
    wft = jnp.tile(fc_w.reshape(-1).astype(jnp.float32), m) / float(m)       # fc weight / M (mean-pool fold)
    bw = jnp.stack([bct, wft], axis=0)                                       # (2, M*C) single f32 operand
    return wbig, bw


def _critic_kernel(x_ref, wbig_ref, bw_ref, out_ref):
    # x_ref   : (tb, T*M*F)   bf16 activations, native (t, m, f) flattening
    # wbig_ref: (T*M*F, M*C)  bf16 block-diagonal conv weight (grid-invariant)
    # bw_ref  : (2, M*C)      f32; row 0 = conv bias per (m, c), row 1 = fc weight / M
    # out_ref : (1, 1, tb)    f32 lane-oriented output block
    # One MXU matmul: conv at every movement position for the whole batch tile.
    s = jnp.dot(x_ref[...], wbig_ref[...], preferred_element_type=jnp.float32)   # (tb, M*C) f32
    s = jnp.maximum(s + bw_ref[0:1, :], 0.0)                                      # conv bias + ReLU (VPU)
    # Fused mean-pool + fc as a (1, N) x (tb, N)^T contraction -> (1, tb),
    # so the result lands directly in the output block's orientation.
    y = jax.lax.dot_general(bw_ref[1:2, :], s, (((1,), (1,)), ((), ())),
                            preferred_element_type=jnp.float32)                   # (1, tb)
    out_ref[...] = y[None]                                                        # (1, 1, tb)


def critic_forward(x_local, conv_w, conv_b, fc_w, fc_b, *, params=None,
                   tb=1024, vmem_limit_bytes=None):
    """x_local: (..., timeseries=5, movement, feature=7) float, matching the PyTorch module."""
    lead = x_local.shape[:-3]
    t, m, f = x_local.shape[-3:]
    assert t == TIMESERIES and f == FEATURE
    assert conv_w.shape == (OUT_CH, TIMESERIES, 1, FEATURE)
    c = OUT_CH
    k = t * m * f          # contraction length (e.g. 560 for M=16)
    n = m * c              # conv output channels replicated per movement position
    b = math.prod(lead) if lead else 1

    if params is None:
        params = prepare_critic_params(conv_w, conv_b, fc_w, fc_b, m)
    wbig, bw = params

    # Batch tile: large (amortize ~0.35 us per-grid-step overhead), multiple of the
    # bf16 sublane-packing granularity, and split into >=2 grid steps whenever the
    # batch allows it so both v7x TensorCores get work on the "parallel" axis.
    tb = max(_SUBLANE, min(tb, _round_up(_cdiv(b, 2), _SUBLANE)))
    tb = _round_up(tb, _SUBLANE)
    # Keep the double-buffered working set inside the smallest per-core VMEM (v7x).
    while tb > 2 * _SUBLANE and _vmem_bytes(tb, k, n) > _VMEM_BUDGET:
        tb = _round_up(tb // 2, _SUBLANE)
    b_pad = _round_up(b, tb)
    grid = (b_pad // tb,)

    # ---- glue (plain JAX): no transpose, contiguous flatten + bf16 cast only ----
    x = x_local.reshape(b, k).astype(jnp.bfloat16)
    if b_pad != b:
        x = jnp.pad(x, ((0, b_pad - b), (0, 0)))    # padded tail rows, sliced off below

    if vmem_limit_bytes is None:
        vmem_limit_bytes = int(min(60 << 20, max(24 << 20, 2 * _vmem_bytes(tb, k, n))))

    out = pl.pallas_call(
        _critic_kernel,
        out_shape=jax.ShapeDtypeStruct((grid[0], 1, tb), jnp.float32),
        grid_spec=pltpu.PrefetchScalarGridSpec(
            num_scalar_prefetch=0,
            grid=grid,
            in_specs=[
                pl.BlockSpec((tb, k), lambda i: (i, 0)),   # bf16 activations: streamed per batch tile
                pl.BlockSpec((k, n), lambda i: (0, 0)),    # bf16 block-diag conv weight: resident
                pl.BlockSpec((2, n), lambda i: (0, 0)),    # f32 conv bias + folded fc weight
            ],
            out_specs=pl.BlockSpec((1, 1, tb), lambda i: (i, 0, 0)),
        ),
        compiler_params=pltpu.CompilerParams(
            dimension_semantics=("parallel",),
            vmem_limit_bytes=vmem_limit_bytes,
        ),
    )(x, wbig, bw)

    # fc bias added here instead of a padded (1,1) VMEM operand inside the kernel.
    out = out.reshape(b_pad)[:b] + fc_b.astype(jnp.float32).reshape(())
    return out.reshape(*lead, 1)


def _reference_forward(x_local, conv_w, conv_b, fc_w, fc_b):
    """Pure-JAX f32 reference mirroring the PyTorch forward exactly."""
    lead = x_local.shape[:-3]
    t, m, f = x_local.shape[-3:]
    x = x_local.reshape(-1, t, m, f)
    s = jnp.einsum("bcmk,ock->bom", x, conv_w[:, :, 0, :]) + conv_b[None, :, None]
    s = jax.nn.relu(s)             # (B, 32, M)
    pooled = jnp.mean(s, axis=-1)  # (B, 32)
    y = pooled @ fc_w.T + fc_b     # (B, 1)
    return y.reshape(*lead, 1)


if __name__ == "__main__":
    key = jax.random.PRNGKey(0)
    k_x, k_cw, k_cb, k_fw, k_fb, k_x2 = jax.random.split(key, 6)

    # deterministic parameter init (synthetic, PyTorch shapes)
    conv_w = jax.random.normal(k_cw, (OUT_CH, TIMESERIES, 1, FEATURE), dtype=jnp.float32) * 0.1
    conv_b = jax.random.normal(k_cb, (OUT_CH,), dtype=jnp.float32) * 0.1
    fc_w = jax.random.normal(k_fw, (1, OUT_CH), dtype=jnp.float32) * 0.1
    fc_b = jax.random.normal(k_fb, (1,), dtype=jnp.float32) * 0.1

    # Test 1: small shapes consistent with the module: leading (env=2, nagents=8) -> B=16,
    # timeseries=5, movement=16, feature=7.  Weight prep hoisted and reused.
    env, nagents, movement = 2, 8, 16
    params16 = prepare_critic_params(conv_w, conv_b, fc_w, fc_b, movement)
    x_local = jax.random.normal(
        k_x, (env, nagents, TIMESERIES, movement, FEATURE), dtype=jnp.float32
    )
    out = jax.block_until_ready(
        critic_forward(x_local, conv_w, conv_b, fc_w, fc_b, params=params16)
    )
    ref = _reference_forward(x_local, conv_w, conv_b, fc_w, fc_b)
    assert out.shape == (env, nagents, 1), out.shape
    # bf16 streamed activations/weights -> looser tolerance vs the f32 reference.
    assert jnp.allclose(out, ref, atol=2e-2, rtol=2e-2), (out, ref)

    # Test 2: ragged batch + multi-step grid + padding path (B=65 padded to 80, tb=16, M=24).
    env2, nagents2, movement2 = 5, 13, 24
    x_local2 = jax.random.normal(
        k_x2, (env2, nagents2, TIMESERIES, movement2, FEATURE), dtype=jnp.float32
    )
    out2 = jax.block_until_ready(
        critic_forward(x_local2, conv_w, conv_b, fc_w, fc_b, tb=16)
    )
    ref2 = _reference_forward(x_local2, conv_w, conv_b, fc_w, fc_b)
    assert out2.shape == (env2, nagents2, 1), out2.shape
    assert jnp.allclose(out2, ref2, atol=2e-2, rtol=2e-2), (out2, ref2)

    print("KERNEL_OK")
</pallas_src>

<mosaic_0001>
module attributes {stable_mosaic.version = 11 : i64} {
  func.func @_critic_kernel(%arg0: i32, %arg1: memref<16x560xbf16, #tpu.memory_space<vmem>>, %arg2: memref<560x512xbf16, #tpu.memory_space<vmem>>, %arg3: memref<2x512xf32, #tpu.memory_space<vmem>>, %arg4: memref<1x1x16xf32, #tpu.memory_space<vmem>>) attributes {dimension_semantics = [#tpu.dimension_semantics<parallel>], iteration_bounds = array<i64: 1>, scalar_prefetch = 0 : i64, scratch_operands = 0 : i64, tpu.core_type = #tpu.core_type<tc>, window_params = [{transform_indices = @transform_0, window_bounds = array<i64: 16, 560>}, {pipeline_mode = #tpu.pipeline_mode<synchronous>, transform_indices = @transform_1, window_bounds = array<i64: 560, 512>}, {pipeline_mode = #tpu.pipeline_mode<synchronous>, transform_indices = @transform_2, window_bounds = array<i64: 2, 512>}, {transform_indices = @transform_3, window_bounds = array<i64: 1, 1, 16>}]} {
    %c0 = arith.constant 0 : index
    %c0_0 = arith.constant 0 : index
    %0 = vector.load %arg1[%c0, %c0_0] : memref<16x560xbf16, #tpu.memory_space<vmem>>, vector<16x560xbf16>
    %c0_1 = arith.constant 0 : index
    %c0_2 = arith.constant 0 : index
    %1 = vector.load %arg2[%c0_1, %c0_2] : memref<560x512xbf16, #tpu.memory_space<vmem>>, vector<560x512xbf16>
    %cst = arith.constant dense<0.000000e+00> : vector<16x512xf32>
    %2 = tpu.matmul %0, %1, %cst {dimension_numbers = #tpu.dot_dimension_numbers<[1], [0], [0], [1], [0, 0, 1, 1], [], []>} : vector<16x560xbf16>, vector<560x512xbf16>, vector<16x512xf32> -> vector<16x512xf32>
    %c0_3 = arith.constant 0 : index
    %c0_4 = arith.constant 0 : index
    %3 = vector.load %arg3[%c0_3, %c0_4] : memref<2x512xf32, #tpu.memory_space<vmem>>, vector<1x512xf32>
    %4 = vector.broadcast %3 : vector<1x512xf32> to vector<16x512xf32>
    %5 = arith.addf %2, %4 : vector<16x512xf32>
    %cst_5 = arith.constant 0.000000e+00 : f32
    %6 = vector.broadcast %cst_5 : f32 to vector<16x512xf32>
    %7 = arith.maximumf %5, %6 : vector<16x512xf32>
    %c1 = arith.constant 1 : index
    %c0_6 = arith.constant 0 : index
    %8 = vector.load %arg3[%c1, %c0_6] : memref<2x512xf32, #tpu.memory_space<vmem>>, vector<1x512xf32>
    %cst_7 = arith.constant dense<0.000000e+00> : vector<1x16xf32>
    %9 = tpu.matmul %8, %7, %cst_7 {dimension_numbers = #tpu.dot_dimension_numbers<[1], [1], [0], [0], [0, 0, 1, 0], [], []>} : vector<1x512xf32>, vector<16x512xf32>, vector<1x16xf32> -> vector<1x16xf32>
    %10 = vector.shape_cast %9 : vector<1x16xf32> to vector<1x1x16xf32>
    %c0_8 = arith.constant 0 : index
    %c0_9 = arith.constant 0 : index
    %c0_10 = arith.constant 0 : index
    %11 = vector.load %arg4[%c0_8, %c0_9, %c0_10] : memref<1x1x16xf32, #tpu.memory_space<vmem>>, vector<1x1x16xf32>
    tpu.vector_store %arg4[%c0_8, %c0_9, %c0_10], %10 {strides = array<i32>} : memref<1x1x16xf32, #tpu.memory_space<vmem>>, vector<1x1x16xf32>,
    return
  }
  func.func @transform_0(%arg0: i32) -> (i32, i32) {
    %c0_i32 = arith.constant 0 : i32
    %c0_i32_0 = arith.constant 0 : i32
    return %arg0, %c0_i32 : i32, i32
  }
  func.func @transform_1(%arg0: i32) -> (i32, i32) {
    %c0_i32 = arith.constant 0 : i32
    %c0_i32_0 = arith.constant 0 : i32
    %c0_i32_1 = arith.constant 0 : i32
    return %c0_i32, %c0_i32_0 : i32, i32
  }
  func.func @transform_2(%arg0: i32) -> (i32, i32) {
    %c0_i32 = arith.constant 0 : i32
    %c0_i32_0 = arith.constant 0 : i32
    %c0_i32_1 = arith.constant 0 : i32
    return %c0_i32, %c0_i32_0 : i32, i32
  }
  func.func @transform_3(%arg0: i32) -> (i32, i32, i32) {
    %c0_i32 = arith.constant 0 : i32
    %c0_i32_0 = arith.constant 0 : i32
    %c0_i32_1 = arith.constant 0 : i32
    return %arg0, %c0_i32, %c0_i32_0 : i32, i32, i32
  }
}

</mosaic_0001>

<llo_original>
// kernel: tpu_custom_call.1
$region0: #{tpu_custom_call.1}
  #allocation0 [shape = 'u32[]', space=smem, size = 0x4, offset = 0x4, fixed_abs, tag = 'smem constant byte address 0x4 - core index']
  #allocation1 [shape = 'u32[144,128]{1,0:T(1,128)}', space=vmem, size = 0x12000, scoped, tag = 'internal scratch']
  %s0 = inlined_call_operand.hbm [shape: bf16[16,560], index: 0, kind: input, shape index: {}]
  %s1 = inlined_call_operand.hbm [shape: bf16[560,512], index: 1, kind: input, shape index: {}]
  %s2 = inlined_call_operand.hbm [shape: f32[2,512], index: 2, kind: input, shape index: {}]
  %s3 = inlined_call_operand.hbm [shape: f32[1,1,16], index: 3, kind: output, shape index: {}]
  %s4 = sld [smem:[#allocation0]]
  $region34: #{tpu_custom_call.1} parent=0
    _
  %s6 = ssub.s32 1, %s4
  %s7 = scalar_select 0, %s6, %s4
  $region1: #{tpu_custom_call.1} parent=0
    #allocation2 [shape = 'u8[20480]{0}', space=vmem, size = 0x5000, scoped, tag = 'input window, operand 0, single buffered']
    #allocation3 [shape = 's32[1]{0}', space=sflag, size = 0x4, scoped, tag = 'scoped memory for tpu_custom_call.1']
    #allocation4 [shape = 's32[1]{0}', space=sflag, size = 0x4, scoped, tag = 'scoped memory for tpu_custom_call.1']
    #allocation5 [shape = 'u8[573440]{0}', space=vmem, size = 0x8c000, scoped, tag = 'input window, operand 1, single buffered']
    #allocation6 [shape = 's32[1]{0}', space=sflag, size = 0x4, scoped, tag = 'scoped memory for tpu_custom_call.1']
    #allocation7 [shape = 'u8[4096]{0}', space=vmem, size = 0x1000, scoped, tag = 'input window, operand 2, single buffered']
    #allocation8 [shape = 'u8[512]{0}', space=vmem, size = 0x400, scoped, tag = 'output window, operand 0, single buffered']
    %8 = vsyncpa [#allocation3], 0
    %9 = vsyncpa [#allocation6], 0
    %10 = vsyncpa [#allocation4], 0
    // Predicated region
    $region2: #{tpu_custom_call.1} parent=1 // pred_check
      _
    $region3: #{tpu_custom_call.1} parent=1 // pred_check_branch
      %12 = sbr.rel (0) target = $region5
    $region4: #{tpu_custom_call.1} parent=1 // pred_region
      %s14 = ssub.s32 640, 640
      %15 = vsyncadd [#allocation3], %s14
      %s16 = sshll.u32 [#allocation2], 4
      %s17 = int_to_ptr.vmem [resolvable:$true] %s16
      %22 = dma.hbm_to_vmem [thread:$0]  %s0, 640, %s17, [#allocation3], 320, 320, 20
    $region5: #{tpu_custom_call.1} parent=1 // pred_fallthru
      _
    // Predicated region
    $region6: #{tpu_custom_call.1} parent=1 // pred_check
      _
    $region7: #{tpu_custom_call.1} parent=1 // pred_check_branch
      %24 = sbr.rel (0) target = $region9
    $region8: #{tpu_custom_call.1} parent=1 // pred_region
      %s26 = ssub.s32 17920, 17920
      %27 = vsyncadd [#allocation6], %s26
      %s28 = sshll.u32 [#allocation5], 4
      %s29 = int_to_ptr.vmem [resolvable:$true] %s28
      %34 = dma.hbm_to_vmem [thread:$0]  %s1, 17920, %s29, [#allocation6], 256, 256, 16
    $region9: #{tpu_custom_call.1} parent=1 // pred_fallthru
      _
    // Predicated region
    $region10: #{tpu_custom_call.1} parent=1 // pred_check
      _
    $region11: #{tpu_custom_call.1} parent=1 // pred_check_branch
      %36 = sbr.rel (0) target = $region13
    $region12: #{tpu_custom_call.1} parent=1 // pred_region
      %s38 = ssub.s32 128, 128
      %39 = vsyncadd [#allocation6], %s38
      %s41 = sshll.u32 [#allocation7], 4
      %s42 = int_to_ptr.vmem [resolvable:$true] %s41
      %44 = dma.hbm_to_vmem [thread:$0]  %s2, 128, %s42, [#allocation6]
    $region13: #{tpu_custom_call.1} parent=1 // pred_fallthru
      _
    // Predicated region
    $region14: #{tpu_custom_call.1} parent=1 // pred_check
      _
    $region15: #{tpu_custom_call.1} parent=1 // pred_check_branch
      %46 = sbr.rel (0) target = $region17
    $region16: #{tpu_custom_call.1} parent=1 // pred_region
      %47 = dma.done [#allocation3], 640
    $region17: #{tpu_custom_call.1} parent=1 // pred_fallthru
      _
    // Predicated region
    $region18: #{tpu_custom_call.1} parent=1 // pred_check
      _
    $region19: #{tpu_custom_call.1} parent=1 // pred_check_branch
      %49 = sbr.rel (0) target = $region21
    $region20: #{tpu_custom_call.1} parent=1 // pred_region
      %50 = dma.done [#allocation6], 17920
    $region21: #{tpu_custom_call.1} parent=1 // pred_fallthru
      _
    // Predicated region
    $region22: #{tpu_custom_call.1} parent=1 // pred_check
      _
    $region23: #{tpu_custom_call.1} parent=1 // pred_check_branch
      %52 = sbr.rel (0) target = $region25
    $region24: #{tpu_custom_call.1} parent=1 // pred_region
      %53 = dma.done [#allocation6], 128
    $region25: #{tpu_custom_call.1} parent=1 // pred_fallthru
      _
    %v55 = vld [vmem:[#allocation2] sm:$0xff]
    %v56 = vld [vmem:[#allocation2 + $0x8] sm:$0xff]
    %v57 = vld [vmem:[#allocation2 + $0x10] sm:$0xf]
    %v58 = vld [vmem:[#allocation2 + $0x14] sm:$0xff]
    %v59 = vld [vmem:[#allocation2 + $0x1c] sm:$0xff]
    %v60 = vld [vmem:[#allocation2 + $0x24] sm:$0xf]
    %v61 = vld [vmem:[#allocation5] sm:$0xff]
    %v62 = vld [vmem:[#allocation5 + $0x8] sm:$0xff]
    %v63 = vld [vmem:[#allocation5 + $0x10] sm:$0xff]
    %v64 = vld [vmem:[#allocation5 + $0x18] sm:$0xff]
    %v65 = vld [vmem:[#allocation5 + $0x20] sm:$0xff]
    %v66 = vld [vmem:[#allocation5 + $0x28] sm:$0xff]
    %v67 = vld [vmem:[#allocation5 + $0x30] sm:$0xff]
    %v68 = vld [vmem:[#allocation5 + $0x38] sm:$0xff]
    %v69 = vld [vmem:[#allocation5 + $0x40] sm:$0xff]
    %v70 = vld [vmem:[#allocation5 + $0x48] sm:$0xff]
    %v71 = vld [vmem:[#allocation5 + $0x50] sm:$0xff]
    %v72 = vld [vmem:[#allocation5 + $0x58] sm:$0xff]
    %v73 = vld [vmem:[#allocation5 + $0x60] sm:$0xff]
    %v74 = vld [vmem:[#allocation5 + $0x68] sm:$0xff]
    %v75 = vld [vmem:[#allocation5 + $0x70] sm:$0xff]
    %v76 = vld [vmem:[#allocation5 + $0x78] sm:$0xff]
    %v77 = vld [vmem:[#allocation5 + $0x80] sm:$0xff]
    %v78 = vld [vmem:[#allocation5 + $0x88] sm:$0xff]
    %v79 = vld [vmem:[#allocation5 + $0x90] sm:$0xff]
    %v80 = vld [vmem:[#allocation5 + $0x98] sm:$0xff]
    %v81 = vld [vmem:[#allocation5 + $0xa0] sm:$0xff]
    %v82 = vld [vmem:[#allocation5 + $0xa8] sm:$0xff]
    %v83 = vld [vmem:[#allocation5 + $0xb0] sm:$0xff]
    %v84 = vld [vmem:[#allocation5 + $0xb8] sm:$0xff]
    %v85 = vld [vmem:[#allocation5 + $0xc0] sm:$0xff]
    %v86 = vld [vmem:[#allocation5 + $0xc8] sm:$0xff]
    %v87 = vld [vmem:[#allocation5 + $0xd0] sm:$0xff]
    %v88 = vld [vmem:[#allocation5 + $0xd8] sm:$0xff]
    %v89 = vld [vmem:[#allocation5 + $0xe0] sm:$0xff]
    %v90 = vld [vmem:[#allocation5 + $0xe8] sm:$0xff]
    %v91 = vld [vmem:[#allocation5 + $0xf0] sm:$0xff]
    %v92 = vld [vmem:[#allocation5 + $0xf8] sm:$0xff]
    %v93 = vld [vmem:[#allocation5 + $0x100] sm:$0xff]
    %v94 = vld [vmem:[#allocation5 + $0x108] sm:$0xff]
    %v95 = vld [vmem:[#allocation5 + $0x110] sm:$0xff]
    %v96 = vld [vmem:[#allocation5 + $0x118] sm:$0xff]
    %v97 = vld [vmem:[#allocation5 + $0x120] sm:$0xff]
    %v98 = vld [vmem:[#allocation5 + $0x128] sm:$0xff]
    %v99 = vld [vmem:[#allocation5 + $0x130] sm:$0xff]
    %v100 = vld [vmem:[#allocation5 + $0x138] sm:$0xff]
    %v101 = vld [vmem:[#allocation5 + $0x140] sm:$0xff]
    %v102 = vld [vmem:[#allocation5 + $0x148] sm:$0xff]
    %v103 = vld [vmem:[#allocation5 + $0x150] sm:$0xff]
    %v104 = vld [vmem:[#allocation5 + $0x158] sm:$0xff]
    %v105 = vld [vmem:[#allocation5 + $0x160] sm:$0xff]
    %v106 = vld [vmem:[#allocation5 + $0x168] sm:$0xff]
    %v107 = vld [vmem:[#allocation5 + $0x170] sm:$0xff]
    %v108 = vld [vmem:[#allocation5 + $0x178] sm:$0xff]
    %v109 = vld [vmem:[#allocation5 + $0x180] sm:$0xff]
    %v110 = vld [vmem:[#allocation5 + $0x188] sm:$0xff]
    %v111 = vld [vmem:[#allocation5 + $0x190] sm:$0xff]
    %v112 = vld [vmem:[#allocation5 + $0x198] sm:$0xff]
    %v113 = vld [vmem:[#allocation5 + $0x1a0] sm:$0xff]
    %v114 = vld [vmem:[#allocation5 + $0x1a8] sm:$0xff]
    %v115 = vld [vmem:[#allocation5 + $0x1b0] sm:$0xff]
    %v116 = vld [vmem:[#allocation5 + $0x1b8] sm:$0xff]
    %v117 = vld [vmem:[#allocation5 + $0x1c0] sm:$0xff]
    %v118 = vld [vmem:[#allocation5 + $0x1c8] sm:$0xff]
    %v119 = vld [vmem:[#allocation5 + $0x1d0] sm:$0xff]
    %v120 = vld [vmem:[#allocation5 + $0x1d8] sm:$0xff]
    %v121 = vld [vmem:[#allocation5 + $0x1e0] sm:$0xff]
    %v122 = vld [vmem:[#allocation5 + $0x1e8] sm:$0xff]
    %v123 = vld [vmem:[#allocation5 + $0x1f0] sm:$0xff]
    %v124 = vld [vmem:[#allocation5 + $0x1f8] sm:$0xff]
    %v125 = vld [vmem:[#allocation5 + $0x200] sm:$0xff]
    %v126 = vld [vmem:[#allocation5 + $0x208] sm:$0xff]
    %v127 = vld [vmem:[#allocation5 + $0x210] sm:$0xff]
    %v128 = vld [vmem:[#allocation5 + $0x218] sm:$0xff]
    %v129 = vld [vmem:[#allocation5 + $0x220] sm:$0xff]
    %v130 = vld [vmem:[#allocation5 + $0x228] sm:$0xff]
    %v131 = vld [vmem:[#allocation5 + $0x230] sm:$0xff]
    %v132 = vld [vmem:[#allocation5 + $0x238] sm:$0xff]
    %v133 = vld [vmem:[#allocation5 + $0x240] sm:$0xff]
    %v134 = vld [vmem:[#allocation5 + $0x248] sm:$0xff]
    %v135 = vld [vmem:[#allocation5 + $0x250] sm:$0xff]
    %v136 = vld [vmem:[#allocation5 + $0x258] sm:$0xff]
    %v137 = vld [vmem:[#allocation5 + $0x260] sm:$0xff]
    %v138 = vld [vmem:[#allocation5 + $0x268] sm:$0xff]
    %v139 = vld [vmem:[#allocation5 + $0x270] sm:$0xff]
    %v140 = vld [vmem:[#allocation5 + $0x278] sm:$0xff]
    %v141 = vld [vmem:[#allocation5 + $0x280] sm:$0xff]
    %v142 = vld [vmem:[#allocation5 + $0x288] sm:$0xff]
    %v143 = vld [vmem:[#allocation5 + $0x290] sm:$0xff]
    %v144 = vld [vmem:[#allocation5 + $0x298] sm:$0xff]
    %v145 = vld [vmem:[#allocation5 + $0x2a0] sm:$0xff]
    %v146 = vld [vmem:[#allocation5 + $0x2a8] sm:$0xff]
    %v147 = vld [vmem:[#allocation5 + $0x2b0] sm:$0xff]
    %v148 = vld [vmem:[#allocation5 + $0x2b8] sm:$0xff]
    %v149 = vld [vmem:[#allocation5 + $0x2c0] sm:$0xff]
    %v150 = vld [vmem:[#allocation5 + $0x2c8] sm:$0xff]
    %v151 = vld [vmem:[#allocation5 + $0x2d0] sm:$0xff]
    %v152 = vld [vmem:[#allocation5 + $0x2d8] sm:$0xff]
    %v153 = vld [vmem:[#allocation5 + $0x2e0] sm:$0xff]
    %v154 = vld [vmem:[#allocation5 + $0x2e8] sm:$0xff]
    %v155 = vld [vmem:[#allocation5 + $0x2f0] sm:$0xff]
    %v156 = vld [vmem:[#allocation5 + $0x2f8] sm:$0xff]
    %v157 = vld [vmem:[#allocation5 + $0x300] sm:$0xff]
    %v158 = vld [vmem:[#allocation5 + $0x308] sm:$0xff]
    %v159 = vld [vmem:[#allocation5 + $0x310] sm:$0xff]
    %v160 = vld [vmem:[#allocation5 + $0x318] sm:$0xff]
    %v161 = vld [vmem:[#allocation5 + $0x320] sm:$0xff]
    %v162 = vld [vmem:[#allocation5 + $0x328] sm:$0xff]
    %v163 = vld [vmem:[#allocation5 + $0x330] sm:$0xff]
    %v164 = vld [vmem:[#allocation5 + $0x338] sm:$0xff]
    %v165 = vld [vmem:[#allocation5 + $0x340] sm:$0xff]
    %v166 = vld [vmem:[#allocation5 + $0x348] sm:$0xff]
    %v167 = vld [vmem:[#allocation5 + $0x350] sm:$0xff]
    %v168 = vld [vmem:[#allocation5 + $0x358] sm:$0xff]
    %v169 = vld [vmem:[#allocation5 + $0x360] sm:$0xff]
    %v170 = vld [vmem:[#allocation5 + $0x368] sm:$0xff]
    %v171 = vld [vmem:[#allocation5 + $0x370] sm:$0xff]
    %v172 = vld [vmem:[#allocation5 + $0x378] sm:$0xff]
    %v173 = vld [vmem:[#allocation5 + $0x380] sm:$0xff]
    %v174 = vld [vmem:[#allocation5 + $0x388] sm:$0xff]
    %v175 = vld [vmem:[#allocation5 + $0x390] sm:$0xff]
    %v176 = vld [vmem:[#allocation5 + $0x398] sm:$0xff]
    %v177 = vld [vmem:[#allocation5 + $0x3a0] sm:$0xff]
    %v178 = vld [vmem:[#allocation5 + $0x3a8] sm:$0xff]
    %v179 = vld [vmem:[#allocation5 + $0x3b0] sm:$0xff]
    %v180 = vld [vmem:[#allocation5 + $0x3b8] sm:$0xff]
    %v181 = vld [vmem:[#allocation5 + $0x3c0] sm:$0xff]
    %v182 = vld [vmem:[#allocation5 + $0x3c8] sm:$0xff]
    %v183 = vld [vmem:[#allocation5 + $0x3d0] sm:$0xff]
    %v184 = vld [vmem:[#allocation5 + $0x3d8] sm:$0xff]
    %v185 = vld [vmem:[#allocation5 + $0x3e0] sm:$0xff]
    %v186 = vld [vmem:[#allocation5 + $0x3e8] sm:$0xff]
    %v187 = vld [vmem:[#allocation5 + $0x3f0] sm:$0xff]
    %v188 = vld [vmem:[#allocation5 + $0x3f8] sm:$0xff]
    %v189 = vld [vmem:[#allocation5 + $0x400] sm:$0xff]
    %v190 = vld [vmem:[#allocation5 + $0x408] sm:$0xff]
    %v191 = vld [vmem:[#allocation5 + $0x410] sm:$0xff]
    %v192 = vld [vmem:[#allocation5 + $0x418] sm:$0xff]
    %v193 = vld [vmem:[#allocation5 + $0x420] sm:$0xff]
    %v194 = vld [vmem:[#allocation5 + $0x428] sm:$0xff]
    %v195 = vld [vmem:[#allocation5 + $0x430] sm:$0xff]
    %v196 = vld [vmem:[#allocation5 + $0x438] sm:$0xff]
    %v197 = vld [vmem:[#allocation5 + $0x440] sm:$0xff]
    %v198 = vld [vmem:[#allocation5 + $0x448] sm:$0xff]
    %v199 = vld [vmem:[#allocation5 + $0x450] sm:$0xff]
    %v200 = vld [vmem:[#allocation5 + $0x458] sm:$0xff]
    %v201 = vld [vmem:[#allocation7] ss:$2 sm:$0xf]
    %v203 = vlaneseq
    %v204 = vshrl.u32 %v203, 7
    %v205 = vsub.s32 0, %v204
    %v206 = vrot.slane %v201, %v205
    %v207 = vlaneseq
    %v208 = vshrl.u32 %v207, 7
    %v209 = vsub.s32 1, %v208
    %v210 = vrot.slane %v201, %v209
    %v211 = vlaneseq
    %v212 = vshrl.u32 %v211, 7
    %v213 = vsub.s32 2, %v212
    %v214 = vrot.slane %v201, %v213
    %v215 = vlaneseq
    %v216 = vshrl.u32 %v215, 7
    %v217 = vsub.s32 3, %v216
    %v218 = vrot.slane %v201, %v217
    %v229 = vunpack.c.l.b16 %v55
    %v230 = vunpack.c.h.b16 %v55
    %v231 = vunpack.c.l.b16 %v56
    %v232 = vunpack.c.h.b16 %v56
    %v233 = vunpack.c.l.b16 %v57
    %v234 = vunpack.c.l.b16 %v58
    %v235 = vunpack.c.h.b16 %v58
    %v236 = vunpack.c.l.b16 %v59
    %v237 = vunpack.c.h.b16 %v59
    %v238 = vunpack.c.l.b16 %v60
    %v239 = vpack.c.b16 %v234, %v229
    %v240 = vpack.c.b16 %v235, %v230
    %v241 = vpack.c.b16 %v236, %v231
    %v242 = vpack.c.b16 %v237, %v232
    %v243 = vpack.c.b16 %v238, %v233
    %v388 = vunpack.c.l.b16 %v61
    %v389 = vunpack.c.h.b16 %v61
    %v390 = vunpack.c.l.b16 %v62
    %v391 = vunpack.c.h.b16 %v62
    %v392 = vunpack.c.l.b16 %v63
    %v393 = vunpack.c.h.b16 %v63
    %v394 = vunpack.c.l.b16 %v64
    %v395 = vunpack.c.h.b16 %v64
    %v396 = vunpack.c.l.b16 %v65
    %v397 = vunpack.c.h.b16 %v65
    %v398 = vunpack.c.l.b16 %v66
    %v399 = vunpack.c.h.b16 %v66
    %v400 = vunpack.c.l.b16 %v67
    %v401 = vunpack.c.h.b16 %v67
    %v402 = vunpack.c.l.b16 %v68
    %v403 = vunpack.c.h.b16 %v68
    %v404 = vunpack.c.l.b16 %v69
    %v405 = vunpack.c.h.b16 %v69
    %v406 = vunpack.c.l.b16 %v70
    %v407 = vunpack.c.h.b16 %v70
    %v408 = vunpack.c.l.b16 %v71
    %v409 = vunpack.c.h.b16 %v71
    %v410 = vunpack.c.l.b16 %v72
    %v411 = vunpack.c.h.b16 %v72
    %v412 = vunpack.c.l.b16 %v73
    %v413 = vunpack.c.h.b16 %v73
    %v414 = vunpack.c.l.b16 %v74
    %v415 = vunpack.c.h.b16 %v74
    %v416 = vunpack.c.l.b16 %v75
    %v417 = vunpack.c.h.b16 %v75
    %v418 = vunpack.c.l.b16 %v76
    %v419 = vunpack.c.h.b16 %v76
    %v420 = vunpack.c.l.b16 %v77
    %v421 = vunpack.c.h.b16 %v77
    %v422 = vunpack.c.l.b16 %v78
    %v423 = vunpack.c.h.b16 %v78
    %v424 = vunpack.c.l.b16 %v79
    %v425 = vunpack.c.h.b16 %v79
    %v426 = vunpack.c.l.b16 %v80
    %v427 = vunpack.c.h.b16 %v80
    %v428 = vunpack.c.l.b16 %v81
    %v429 = vunpack.c.h.b16 %v81
    %v430 = vunpack.c.l.b16 %v82
    %v431 = vunpack.c.h.b16 %v82
    %v432 = vunpack.c.l.b16 %v83
    %v433 = vunpack.c.h.b16 %v83
    %v434 = vunpack.c.l.b16 %v84
    %v435 = vunpack.c.h.b16 %v84
    %v436 = vunpack.c.l.b16 %v85
    %v437 = vunpack.c.h.b16 %v85
    %v438 = vunpack.c.l.b16 %v86
    %v439 = vunpack.c.h.b16 %v86
    %v440 = vunpack.c.l.b16 %v87
    %v441 = vunpack.c.h.b16 %v87
    %v442 = vunpack.c.l.b16 %v88
    %v443 = vunpack.c.h.b16 %v88
    %v444 = vunpack.c.l.b16 %v89
    %v445 = vunpack.c.h.b16 %v89
    %v446 = vunpack.c.l.b16 %v90
    %v447 = vunpack.c.h.b16 %v90
    %v448 = vunpack.c.l.b16 %v91
    %v449 = vunpack.c.h.b16 %v91
    %v450 = vunpack.c.l.b16 %v92
    %v451 = vunpack.c.h.b16 %v92
    %v452 = vunpack.c.l.b16 %v93
    %v453 = vunpack.c.h.b16 %v93
    %v454 = vunpack.c.l.b16 %v94
    %v455 = vunpack.c.h.b16 %v94
    %v456 = vunpack.c.l.b16 %v95
    %v457 = vunpack.c.h.b16 %v95
    %v458 = vunpack.c.l.b16 %v96
    %v459 = vunpack.c.h.b16 %v96
    %v460 = vunpack.c.l.b16 %v97
    %v461 = vunpack.c.h.b16 %v97
    %v462 = vunpack.c.l.b16 %v98
    %v463 = vunpack.c.h.b16 %v98
    %v464 = vunpack.c.l.b16 %v99
    %v465 = vunpack.c.h.b16 %v99
    %v466 = vunpack.c.l.b16 %v100
    %v467 = vunpack.c.h.b16 %v100
    %v468 = vunpack.c.l.b16 %v101
    %v469 = vunpack.c.h.b16 %v101
    %v470 = vunpack.c.l.b16 %v102
    %v471 = vunpack.c.h.b16 %v102
    %v472 = vunpack.c.l.b16 %v103
    %v473 = vunpack.c.h.b16 %v103
    %v474 = vunpack.c.l.b16 %v104
    %v475 = vunpack.c.h.b16 %v104
    %v476 = vunpack.c.l.b16 %v105
    %v477 = vunpack.c.h.b16 %v105
    %v478 = vunpack.c.l.b16 %v106
    %v479 = vunpack.c.h.b16 %v106
    %v480 = vunpack.c.l.b16 %v107
    %v481 = vunpack.c.h.b16 %v107
    %v482 = vunpack.c.l.b16 %v108
    %v483 = vunpack.c.h.b16 %v108
    %v484 = vunpack.c.l.b16 %v109
    %v485 = vunpack.c.h.b16 %v109
    %v486 = vunpack.c.l.b16 %v110
    %v487 = vunpack.c.h.b16 %v110
    %v488 = vunpack.c.l.b16 %v111
    %v489 = vunpack.c.h.b16 %v111
    %v490 = vunpack.c.l.b16 %v112
    %v491 = vunpack.c.h.b16 %v112
    %v492 = vunpack.c.l.b16 %v113
    %v493 = vunpack.c.h.b16 %v113
    %v494 = vunpack.c.l.b16 %v114
    %v495 = vunpack.c.h.b16 %v114
    %v496 = vunpack.c.l.b16 %v115
    %v497 = vunpack.c.h.b16 %v115
    %v498 = vunpack.c.l.b16 %v116
    %v499 = vunpack.c.h.b16 %v116
    %v500 = vunpack.c.l.b16 %v117
    %v501 = vunpack.c.h.b16 %v117
    %v502 = vunpack.c.l.b16 %v118
    %v503 = vunpack.c.h.b16 %v118
    %v504 = vunpack.c.l.b16 %v119
    %v505 = vunpack.c.h.b16 %v119
    %v506 = vunpack.c.l.b16 %v120
    %v507 = vunpack.c.h.b16 %v120
    %v508 = vunpack.c.l.b16 %v121
    %v509 = vunpack.c.h.b16 %v121
    %v510 = vunpack.c.l.b16 %v122
    %v511 = vunpack.c.h.b16 %v122
    %v512 = vunpack.c.l.b16 %v123
    %v513 = vunpack.c.h.b16 %v123
    %v514 = vunpack.c.l.b16 %v124
    %v515 = vunpack.c.h.b16 %v124
    %v516 = vunpack.c.l.b16 %v125
    %v517 = vunpack.c.h.b16 %v125
    %v518 = vunpack.c.l.b16 %v126
    %v519 = vunpack.c.h.b16 %v126
    %v520 = vunpack.c.l.b16 %v127
    %v521 = vunpack.c.h.b16 %v127
    %v522 = vunpack.c.l.b16 %v128
    %v523 = vunpack.c.h.b16 %v128
    %v524 = vunpack.c.l.b16 %v129
    %v525 = vunpack.c.h.b16 %v129
    %v526 = vunpack.c.l.b16 %v130
    %v527 = vunpack.c.h.b16 %v130
    %v528 = vunpack.c.l.b16 %v131
    %v529 = vunpack.c.h.b16 %v131
    %v530 = vunpack.c.l.b16 %v132
    %v531 = vunpack.c.h.b16 %v132
    %v532 = vunpack.c.l.b16 %v133
    %v533 = vunpack.c.h.b16 %v133
    %v534 = vunpack.c.l.b16 %v134
    %v535 = vunpack.c.h.b16 %v134
    %v536 = vunpack.c.l.b16 %v135
    %v537 = vunpack.c.h.b16 %v135
    %v538 = vunpack.c.l.b16 %v136
    %v539 = vunpack.c.h.b16 %v136
    %v540 = vunpack.c.l.b16 %v137
    %v541 = vunpack.c.h.b16 %v137
    %v542 = vunpack.c.l.b16 %v138
    %v543 = vunpack.c.h.b16 %v138
    %v544 = vunpack.c.l.b16 %v139
    %v545 = vunpack.c.h.b16 %v139
    %v546 = vunpack.c.l.b16 %v140
    %v547 = vunpack.c.h.b16 %v140
    %v548 = vunpack.c.l.b16 %v141
    %v549 = vunpack.c.h.b16 %v141
    %v550 = vunpack.c.l.b16 %v142
    %v551 = vunpack.c.h.b16 %v142
    %v552 = vunpack.c.l.b16 %v143
    %v553 = vunpack.c.h.b16 %v143
    %v554 = vunpack.c.l.b16 %v144
    %v555 = vunpack.c.h.b16 %v144
    %v556 = vunpack.c.l.b16 %v145
    %v557 = vunpack.c.h.b16 %v145
    %v558 = vunpack.c.l.b16 %v146
    %v559 = vunpack.c.h.b16 %v146
    %v560 = vunpack.c.l.b16 %v147
    %v561 = vunpack.c.h.b16 %v147
    %v562 = vunpack.c.l.b16 %v148
    %v563 = vunpack.c.h.b16 %v148
    %v564 = vunpack.c.l.b16 %v149
    %v565 = vunpack.c.h.b16 %v149
    %v566 = vunpack.c.l.b16 %v150
    %v567 = vunpack.c.h.b16 %v150
    %v568 = vunpack.c.l.b16 %v151
    %v569 = vunpack.c.h.b16 %v151
    %v570 = vunpack.c.l.b16 %v152
    %v571 = vunpack.c.h.b16 %v152
    %v572 = vunpack.c.l.b16 %v153
    %v573 = vunpack.c.h.b16 %v153
    %v574 = vunpack.c.l.b16 %v154
    %v575 = vunpack.c.h.b16 %v154
    %v576 = vunpack.c.l.b16 %v155
    %v577 = vunpack.c.h.b16 %v155
    %v578 = vunpack.c.l.b16 %v156
    %v579 = vunpack.c.h.b16 %v156
    %v580 = vunpack.c.l.b16 %v157
    %v581 = vunpack.c.h.b16 %v157
    %v582 = vunpack.c.l.b16 %v158
    %v583 = vunpack.c.h.b16 %v158
    %v584 = vunpack.c.l.b16 %v159
    %v585 = vunpack.c.h.b16 %v159
    %v586 = vunpack.c.l.b16 %v160
    %v587 = vunpack.c.h.b16 %v160
    %v588 = vunpack.c.l.b16 %v161
    %v589 = vunpack.c.h.b16 %v161
    %v590 = vunpack.c.l.b16 %v162
    %v591 = vunpack.c.h.b16 %v162
    %v592 = vunpack.c.l.b16 %v163
    %v593 = vunpack.c.h.b16 %v163
    %v594 = vunpack.c.l.b16 %v164
    %v595 = vunpack.c.h.b16 %v164
    %v596 = vunpack.c.l.b16 %v165
    %v597 = vunpack.c.h.b16 %v165
    %v598 = vunpack.c.l.b16 %v166
    %v599 = vunpack.c.h.b16 %v166
    %v600 = vunpack.c.l.b16 %v167
    %v601 = vunpack.c.h.b16 %v167
    %v602 = vunpack.c.l.b16 %v168
    %v603 = vunpack.c.h.b16 %v168
    %v604 = vunpack.c.l.b16 %v169
    %v605 = vunpack.c.h.b16 %v169
    %v606 = vunpack.c.l.b16 %v170
    %v607 = vunpack.c.h.b16 %v170
    %v608 = vunpack.c.l.b16 %v171
    %v609 = vunpack.c.h.b16 %v171
    %v610 = vunpack.c.l.b16 %v172
    %v611 = vunpack.c.h.b16 %v172
    %v612 = vunpack.c.l.b16 %v173
    %v613 = vunpack.c.h.b16 %v173
    %v614 = vunpack.c.l.b16 %v174
    %v615 = vunpack.c.h.b16 %v174
    %v616 = vunpack.c.l.b16 %v175
    %v617 = vunpack.c.h.b16 %v175
    %v618 = vunpack.c.l.b16 %v176
    %v619 = vunpack.c.h.b16 %v176
    %v620 = vunpack.c.l.b16 %v177
    %v621 = vunpack.c.h.b16 %v177
    %v622 = vunpack.c.l.b16 %v178
    %v623 = vunpack.c.h.b16 %v178
    %v624 = vunpack.c.l.b16 %v179
    %v625 = vunpack.c.h.b16 %v179
    %v626 = vunpack.c.l.b16 %v180
    %v627 = vunpack.c.h.b16 %v180
    %v628 = vunpack.c.l.b16 %v181
    %v629 = vunpack.c.h.b16 %v181
    %v630 = vunpack.c.l.b16 %v182
    %v631 = vunpack.c.h.b16 %v182
    %v632 = vunpack.c.l.b16 %v183
    %v633 = vunpack.c.h.b16 %v183
    %v634 = vunpack.c.l.b16 %v184
    %v635 = vunpack.c.h.b16 %v184
    %v636 = vunpack.c.l.b16 %v185
    %v637 = vunpack.c.h.b16 %v185
    %v638 = vunpack.c.l.b16 %v186
    %v639 = vunpack.c.h.b16 %v186
    %v640 = vunpack.c.l.b16 %v187
    %v641 = vunpack.c.h.b16 %v187
    %v642 = vunpack.c.l.b16 %v188
    %v643 = vunpack.c.h.b16 %v188
    %v644 = vunpack.c.l.b16 %v189
    %v645 = vunpack.c.h.b16 %v189
    %v646 = vunpack.c.l.b16 %v190
    %v647 = vunpack.c.h.b16 %v190
    %v648 = vunpack.c.l.b16 %v191
    %v649 = vunpack.c.h.b16 %v191
    %v650 = vunpack.c.l.b16 %v192
    %v651 = vunpack.c.h.b16 %v192
    %v652 = vunpack.c.l.b16 %v193
    %v653 = vunpack.c.h.b16 %v193
    %v654 = vunpack.c.l.b16 %v194
    %v655 = vunpack.c.h.b16 %v194
    %v656 = vunpack.c.l.b16 %v195
    %v657 = vunpack.c.h.b16 %v195
    %v658 = vunpack.c.l.b16 %v196
    %v659 = vunpack.c.h.b16 %v196
    %v660 = vunpack.c.l.b16 %v197
    %v661 = vunpack.c.h.b16 %v197
    %v662 = vunpack.c.l.b16 %v198
    %v663 = vunpack.c.h.b16 %v198
    %v664 = vunpack.c.l.b16 %v199
    %v665 = vunpack.c.h.b16 %v199
    %v666 = vunpack.c.l.b16 %v200
    %v667 = vunpack.c.h.b16 %v200
    %v668 = vpack.c.b16 %v392, %v388
    %v669 = vpack.c.b16 %v393, %v389
    %v670 = vpack.c.b16 %v394, %v390
    %v671 = vpack.c.b16 %v395, %v391
    %v672 = vpack.c.b16 %v400, %v396
    %v673 = vpack.c.b16 %v401, %v397
    %v674 = vpack.c.b16 %v402, %v398
    %v675 = vpack.c.b16 %v403, %v399
    %v676 = vpack.c.b16 %v408, %v404
    %v677 = vpack.c.b16 %v409, %v405
    %v678 = vpack.c.b16 %v410, %v406
    %v679 = vpack.c.b16 %v411, %v407
    %v680 = vpack.c.b16 %v416, %v412
    %v681 = vpack.c.b16 %v417, %v413
    %v682 = vpack.c.b16 %v418, %v414
    %v683 = vpack.c.b16 %v419, %v415
    %v684 = vpack.c.b16 %v424, %v420
    %v685 = vpack.c.b16 %v425, %v421
    %v686 = vpack.c.b16 %v426, %v422
    %v687 = vpack.c.b16 %v427, %v423
    %v688 = vpack.c.b16 %v432, %v428
    %v689 = vpack.c.b16 %v433, %v429
    %v690 = vpack.c.b16 %v434, %v430
    %v691 = vpack.c.b16 %v435, %v431
    %v692 = vpack.c.b16 %v440, %v436
    %v693 = vpack.c.b16 %v441, %v437
    %v694 = vpack.c.b16 %v442, %v438
    %v695 = vpack.c.b16 %v443, %v439
    %v696 = vpack.c.b16 %v448, %v444
    %v697 = vpack.c.b16 %v449, %v445
    %v698 = vpack.c.b16 %v450, %v446
    %v699 = vpack.c.b16 %v451, %v447
    %v700 = vpack.c.b16 %v456, %v452
    %v701 = vpack.c.b16 %v457, %v453
    %v702 = vpack.c.b16 %v458, %v454
    %v703 = vpack.c.b16 %v459, %v455
    %v704 = vpack.c.b16 %v464, %v460
    %v705 = vpack.c.b16 %v465, %v461
    %v706 = vpack.c.b16 %v466, %v462
    %v707 = vpack.c.b16 %v467, %v463
    %v708 = vpack.c.b16 %v472, %v468
    %v709 = vpack.c.b16 %v473, %v469
    %v710 = vpack.c.b16 %v474, %v470
    %v711 = vpack.c.b16 %v475, %v471
    %v712 = vpack.c.b16 %v480, %v476
    %v713 = vpack.c.b16 %v481, %v477
    %v714 = vpack.c.b16 %v482, %v478
    %v715 = vpack.c.b16 %v483, %v479
    %v716 = vpack.c.b16 %v488, %v484
    %v717 = vpack.c.b16 %v489, %v485
    %v718 = vpack.c.b16 %v490, %v486
    %v719 = vpack.c.b16 %v491, %v487
    %v720 = vpack.c.b16 %v496, %v492
    %v721 = vpack.c.b16 %v497, %v493
    %v722 = vpack.c.b16 %v498, %v494
    %v723 = vpack.c.b16 %v499, %v495
    %v724 = vpack.c.b16 %v504, %v500
    %v725 = vpack.c.b16 %v505, %v501
    %v726 = vpack.c.b16 %v506, %v502
    %v727 = vpack.c.b16 %v507, %v503
    %v728 = vpack.c.b16 %v512, %v508
    %v729 = vpack.c.b16 %v513, %v509
    %v730 = vpack.c.b16 %v514, %v510
    %v731 = vpack.c.b16 %v515, %v511
    %v732 = vpack.c.b16 %v520, %v516
    %v733 = vpack.c.b16 %v521, %v517
    %v734 = vpack.c.b16 %v522, %v518
    %v735 = vpack.c.b16 %v523, %v519
    %v736 = vpack.c.b16 %v528, %v524
    %v737 = vpack.c.b16 %v529, %v525
    %v738 = vpack.c.b16 %v530, %v526
    %v739 = vpack.c.b16 %v531, %v527
    %v740 = vpack.c.b16 %v536, %v532
    %v741 = vpack.c.b16 %v537, %v533
    %v742 = vpack.c.b16 %v538, %v534
    %v743 = vpack.c.b16 %v539, %v535
    %v744 = vpack.c.b16 %v544, %v540
    %v745 = vpack.c.b16 %v545, %v541
    %v746 = vpack.c.b16 %v546, %v542
    %v747 = vpack.c.b16 %v547, %v543
    %v748 = vpack.c.b16 %v552, %v548
    %v749 = vpack.c.b16 %v553, %v549
    %v750 = vpack.c.b16 %v554, %v550
    %v751 = vpack.c.b16 %v555, %v551
    %v752 = vpack.c.b16 %v560, %v556
    %v753 = vpack.c.b16 %v561, %v557
    %v754 = vpack.c.b16 %v562, %v558
    %v755 = vpack.c.b16 %v563, %v559
    %v756 = vpack.c.b16 %v568, %v564
    %v757 = vpack.c.b16 %v569, %v565
    %v758 = vpack.c.b16 %v570, %v566
    %v759 = vpack.c.b16 %v571, %v567
    %v760 = vpack.c.b16 %v576, %v572
    %v761 = vpack.c.b16 %v577, %v573
    %v762 = vpack.c.b16 %v578, %v574
    %v763 = vpack.c.b16 %v579, %v575
    %v764 = vpack.c.b16 %v584, %v580
    %v765 = vpack.c.b16 %v585, %v581
    %v766 = vpack.c.b16 %v586, %v582
    %v767 = vpack.c.b16 %v587, %v583
    %v768 = vpack.c.b16 %v592, %v588
    %v769 = vpack.c.b16 %v593, %v589
    %v770 = vpack.c.b16 %v594, %v590
    %v771 = vpack.c.b16 %v595, %v591
    %v772 = vpack.c.b16 %v600, %v596
    %v773 = vpack.c.b16 %v601, %v597
    %v774 = vpack.c.b16 %v602, %v598
    %v775 = vpack.c.b16 %v603, %v599
    %v776 = vpack.c.b16 %v608, %v604
    %v777 = vpack.c.b16 %v609, %v605
    %v778 = vpack.c.b16 %v610, %v606
    %v779 = vpack.c.b16 %v611, %v607
    %v780 = vpack.c.b16 %v616, %v612
    %v781 = vpack.c.b16 %v617, %v613
    %v782 = vpack.c.b16 %v618, %v614
    %v783 = vpack.c.b16 %v619, %v615
    %v784 = vpack.c.b16 %v624, %v620
    %v785 = vpack.c.b16 %v625, %v621
    %v786 = vpack.c.b16 %v626, %v622
    %v787 = vpack.c.b16 %v627, %v623
    %v788 = vpack.c.b16 %v632, %v628
    %v789 = vpack.c.b16 %v633, %v629
    %v790 = vpack.c.b16 %v634, %v630
    %v791 = vpack.c.b16 %v635, %v631
    %v792 = vpack.c.b16 %v640, %v636
    %v793 = vpack.c.b16 %v641, %v637
    %v794 = vpack.c.b16 %v642, %v638
    %v795 = vpack.c.b16 %v643, %v639
    %v796 = vpack.c.b16 %v648, %v644
    %v797 = vpack.c.b16 %v649, %v645
    %v798 = vpack.c.b16 %v650, %v646
    %v799 = vpack.c.b16 %v651, %v647
    %v800 = vpack.c.b16 %v656, %v652
    %v801 = vpack.c.b16 %v657, %v653
    %v802 = vpack.c.b16 %v658, %v654
    %v803 = vpack.c.b16 %v659, %v655
    %v804 = vpack.c.b16 %v664, %v660
    %v805 = vpack.c.b16 %v665, %v661
    %v806 = vpack.c.b16 %v666, %v662
    %v807 = vpack.c.b16 %v667, %v663
    %vm948 = vcmask 392192
    %v950 = vsel %vm948, %v243, 0
    %952 = vmatprep.subr.bf16.mxu0 %v697
    %953 = vmatpush1.bf16.msra.mxu0 %v696
    %954 = vmatprep.subr.bf16.mxu0 %v693
    %955 = vmatpush1.bf16.msra.mxu0 %v692
    %956 = vmatprep.subr.bf16.mxu0 %v689
    %957 = vmatpush1.bf16.msra.mxu0 %v688
    %958 = vmatprep.subr.bf16.mxu0 %v685
    %959 = vmatpush1.bf16.msra.mxu0 %v684
    %960 = vmatprep.subr.bf16.mxu0 %v681
    %961 = vmatpush1.bf16.msra.mxu0 %v680
    %962 = vmatprep.subr.bf16.mxu0 %v677
    %963 = vmatpush1.bf16.msra.mxu0 %v676
    %964 = vmatprep.subr.bf16.mxu0 %v673
    %965 = vmatpush1.bf16.msra.mxu0 %v672
    %966 = vmatprep.subr.bf16.mxu0 %v669
    %967 = vmatpush1.bf16.msra.mxu0 %v668
    %968 = vmatprep.subr.bf16.mxu0 %v729
    %969 = vmatpush2.bf16.msra.mxu0 %v728
    %970 = vmatprep.subr.bf16.mxu0 %v725
    %971 = vmatpush2.bf16.msra.mxu0 %v724
    %972 = vmatprep.subr.bf16.mxu0 %v721
    %973 = vmatpush2.bf16.msra.mxu0 %v720
    %974 = vmatprep.subr.bf16.mxu0 %v717
    %975 = vmatpush2.bf16.msra.mxu0 %v716
    %976 = vmatprep.subr.bf16.mxu0 %v713
    %977 = vmatpush2.bf16.msra.mxu0 %v712
    %978 = vmatprep.subr.bf16.mxu0 %v709
    %979 = vmatpush2.bf16.msra.mxu0 %v708
    %980 = vmatprep.subr.bf16.mxu0 %v705
    %981 = vmatpush2.bf16.msra.mxu0 %v704
    %982 = vmatprep.subr.bf16.mxu0 %v701
    %983 = vmatpush2.bf16.msra.mxu0 %v700
    %984 = vmatprep.mubr.bf16.mxu0 %v240
    %985 = vmatmul.mubr.bf16.gmra.mxu0 %v239
    %v986 = vpop.f32.mrf.mxu0
    %v987 = vadd.f32 %v206, %v986
    %v988 = vpop.f32.mrf.mxu0
    %v989 = vadd.f32 %v210, %v988
    %v990 = vpop.f32.mrf.mxu0
    %v991 = vadd.f32 %v206, %v990
    %v992 = vpop.f32.mrf.mxu0
    %v993 = vadd.f32 %v210, %v992
    %994 = vdwg.mxu0
    %995 = vmatprep.subr.bf16.mxu0 %v761
    %996 = vmatpush1.bf16.msra.mxu0 %v760
    %997 = vmatprep.subr.bf16.mxu0 %v757
    %998 = vmatpush1.bf16.msra.mxu0 %v756
    %999 = vmatprep.subr.bf16.mxu0 %v753
    %1000 = vmatpush1.bf16.msra.mxu0 %v752
    %1001 = vmatprep.subr.bf16.mxu0 %v749
    %1002 = vmatpush1.bf16.msra.mxu0 %v748
    %1003 = vmatprep.subr.bf16.mxu0 %v745
    %1004 = vmatpush1.bf16.msra.mxu0 %v744
    %1005 = vmatprep.subr.bf16.mxu0 %v741
    %1006 = vmatpush1.bf16.msra.mxu0 %v740
    %1007 = vmatprep.subr.bf16.mxu0 %v737
    %1008 = vmatpush1.bf16.msra.mxu0 %v736
    %1009 = vmatprep.subr.bf16.mxu0 %v733
    %1010 = vmatpush1.bf16.msra.mxu0 %v732
    %1011 = vmatprep.subr.bf16.mxu0 %v793
    %1012 = vmatpush2.bf16.msra.mxu0 %v792
    %1013 = vmatprep.subr.bf16.mxu0 %v789
    %1014 = vmatpush2.bf16.msra.mxu0 %v788
    %1015 = vmatprep.subr.bf16.mxu0 %v785
    %1016 = vmatpush2.bf16.msra.mxu0 %v784
    %1017 = vmatprep.subr.bf16.mxu0 %v781
    %1018 = vmatpush2.bf16.msra.mxu0 %v780
    %1019 = vmatprep.subr.bf16.mxu0 %v777
    %1020 = vmatpush2.bf16.msra.mxu0 %v776
    %1021 = vmatprep.subr.bf16.mxu0 %v773
    %1022 = vmatpush2.bf16.msra.mxu0 %v772
    %1023 = vmatprep.subr.bf16.mxu0 %v769
    %1024 = vmatpush2.bf16.msra.mxu0 %v768
    %1025 = vmatprep.subr.bf16.mxu0 %v765
    %1026 = vmatpush2.bf16.msra.mxu0 %v764
    %1027 = vmatprep.mubr.bf16.mxu0 %v242
    %1028 = vmatmul.mubr.bf16.gmra.mxu0 %v241
    %v1029 = vpop.f32.mrf.mxu0
    %v1030 = vadd.f32 %v987, %v1029
    %v1031 = vpop.f32.mrf.mxu0
    %v1032 = vadd.f32 %v989, %v1031
    %v1033 = vpop.f32.mrf.mxu0
    %v1034 = vadd.f32 %v991, %v1033
    %v1035 = vpop.f32.mrf.mxu0
    %v1036 = vadd.f32 %v993, %v1035
    %1037 = vdwg.mxu0
    %1038 = vmatprep.subr.bf16.mxu0 0
    %1039 = vmatpush1.bf16.msra.mxu0 0
    %1040 = vmatprep.subr.bf16.mxu0 0
    %1041 = vmatpush1.bf16.msra.mxu0 0
    %1042 = vmatprep.subr.bf16.mxu0 0
    %1043 = vmatpush1.bf16.msra.mxu0 0
    %1044 = vmatprep.subr.bf16.mxu0 0
    %1045 = vmatpush1.bf16.msra.mxu0 0
    %1046 = vmatprep.subr.bf16.mxu0 0
    %1047 = vmatpush1.bf16.msra.mxu0 0
    %1048 = vmatprep.subr.bf16.mxu0 %v805
    %1049 = vmatpush1.bf16.msra.mxu0 %v804
    %1050 = vmatprep.subr.bf16.mxu0 %v801
    %1051 = vmatpush1.bf16.msra.mxu0 %v800
    %1052 = vmatprep.subr.bf16.mxu0 %v797
    %1053 = vmatpush1.bf16.msra.mxu0 %v796
    %1054 = vmatprep.subr.bf16.mxu0 0
    %1055 = vmatpush2.bf16.msra.mxu0 0
    %1056 = vmatprep.subr.bf16.mxu0 0
    %1057 = vmatpush2.bf16.msra.mxu0 0
    %1058 = vmatprep.subr.bf16.mxu0 0
    %1059 = vmatpush2.bf16.msra.mxu0 0
    %1060 = vmatprep.subr.bf16.mxu0 0
    %1061 = vmatpush2.bf16.msra.mxu0 0
    %1062 = vmatprep.subr.bf16.mxu0 0
    %1063 = vmatpush2.bf16.msra.mxu0 0
    %1064 = vmatprep.subr.bf16.mxu0 0
    %1065 = vmatpush2.bf16.msra.mxu0 0
    %1066 = vmatprep.subr.bf16.mxu0 0
    %1067 = vmatpush2.bf16.msra.mxu0 0
    %1068 = vmatprep.subr.bf16.mxu0 0
    %1069 = vmatpush2.bf16.msra.mxu0 0
    %1070 = vmatprep.mubr.bf16.mxu0 0
    %1071 = vmatmul.mubr.bf16.gmra.mxu0 %v950
    %v1072 = vpop.f32.mrf.mxu0
    %v1073 = vadd.f32 %v1030, %v1072
    %v1074 = vpop.f32.mrf.mxu0
    %v1075 = vadd.f32 %v1032, %v1074
    %v1076 = vpop.f32.mrf.mxu0
    %v1077 = vadd.f32 %v1034, %v1076
    %v1078 = vpop.f32.mrf.mxu0
    %v1079 = vadd.f32 %v1036, %v1078
    %1080 = vdwg.mxu0
    %1081 = vmatprep.subr.bf16.mxu0 %v699
    %1082 = vmatpush1.bf16.msra.mxu0 %v698
    %1083 = vmatprep.subr.bf16.mxu0 %v695
    %1084 = vmatpush1.bf16.msra.mxu0 %v694
    %1085 = vmatprep.subr.bf16.mxu0 %v691
    %1086 = vmatpush1.bf16.msra.mxu0 %v690
    %1087 = vmatprep.subr.bf16.mxu0 %v687
    %1088 = vmatpush1.bf16.msra.mxu0 %v686
    %1089 = vmatprep.subr.bf16.mxu0 %v683
    %1090 = vmatpush1.bf16.msra.mxu0 %v682
    %1091 = vmatprep.subr.bf16.mxu0 %v679
    %1092 = vmatpush1.bf16.msra.mxu0 %v678
    %1093 = vmatprep.subr.bf16.mxu0 %v675
    %1094 = vmatpush1.bf16.msra.mxu0 %v674
    %1095 = vmatprep.subr.bf16.mxu0 %v671
    %1096 = vmatpush1.bf16.msra.mxu0 %v670
    %1097 = vmatprep.subr.bf16.mxu0 %v731
    %1098 = vmatpush2.bf16.msra.mxu0 %v730
    %1099 = vmatprep.subr.bf16.mxu0 %v727
    %1100 = vmatpush2.bf16.msra.mxu0 %v726
    %1101 = vmatprep.subr.bf16.mxu0 %v723
    %1102 = vmatpush2.bf16.msra.mxu0 %v722
    %1103 = vmatprep.subr.bf16.mxu0 %v719
    %1104 = vmatpush2.bf16.msra.mxu0 %v718
    %1105 = vmatprep.subr.bf16.mxu0 %v715
    %1106 = vmatpush2.bf16.msra.mxu0 %v714
    %1107 = vmatprep.subr.bf16.mxu0 %v711
    %1108 = vmatpush2.bf16.msra.mxu0 %v710
    %1109 = vmatprep.subr.bf16.mxu0 %v707
    %1110 = vmatpush2.bf16.msra.mxu0 %v706
    %1111 = vmatprep.subr.bf16.mxu0 %v703
    %1112 = vmatpush2.bf16.msra.mxu0 %v702
    %1113 = vmatprep.mubr.bf16.mxu0 %v240
    %1114 = vmatmul.mubr.bf16.gmra.mxu0 %v239
    %v1115 = vpop.f32.mrf.mxu0
    %v1116 = vadd.f32 %v214, %v1115
    %v1117 = vpop.f32.mrf.mxu0
    %v1118 = vadd.f32 %v218, %v1117
    %v1119 = vpop.f32.mrf.mxu0
    %v1120 = vadd.f32 %v214, %v1119
    %v1121 = vpop.f32.mrf.mxu0
    %v1122 = vadd.f32 %v218, %v1121
    %1123 = vdwg.mxu0
    %1124 = vmatprep.subr.bf16.mxu0 %v763
    %1125 = vmatpush1.bf16.msra.mxu0 %v762
    %1126 = vmatprep.subr.bf16.mxu0 %v759
    %1127 = vmatpush1.bf16.msra.mxu0 %v758
    %1128 = vmatprep.subr.bf16.mxu0 %v755
    %1129 = vmatpush1.bf16.msra.mxu0 %v754
    %1130 = vmatprep.subr.bf16.mxu0 %v751
    %1131 = vmatpush1.bf16.msra.mxu0 %v750
    %1132 = vmatprep.subr.bf16.mxu0 %v747
    %1133 = vmatpush1.bf16.msra.mxu0 %v746
    %1134 = vmatprep.subr.bf16.mxu0 %v743
    %1135 = vmatpush1.bf16.msra.mxu0 %v742
    %1136 = vmatprep.subr.bf16.mxu0 %v739
    %1137 = vmatpush1.bf16.msra.mxu0 %v738
    %1138 = vmatprep.subr.bf16.mxu0 %v735
    %1139 = vmatpush1.bf16.msra.mxu0 %v734
    %1140 = vmatprep.subr.bf16.mxu0 %v795
    %1141 = vmatpush2.bf16.msra.mxu0 %v794
    %1142 = vmatprep.subr.bf16.mxu0 %v791
    %1143 = vmatpush2.bf16.msra.mxu0 %v790
    %1144 = vmatprep.subr.bf16.mxu0 %v787
    %1145 = vmatpush2.bf16.msra.mxu0 %v786
    %1146 = vmatprep.subr.bf16.mxu0 %v783
    %1147 = vmatpush2.bf16.msra.mxu0 %v782
    %1148 = vmatprep.subr.bf16.mxu0 %v779
    %1149 = vmatpush2.bf16.msra.mxu0 %v778
    %1150 = vmatprep.subr.bf16.mxu0 %v775
    %1151 = vmatpush2.bf16.msra.mxu0 %v774
    %1152 = vmatprep.subr.bf16.mxu0 %v771
    %1153 = vmatpush2.bf16.msra.mxu0 %v770
    %1154 = vmatprep.subr.bf16.mxu0 %v767
    %1155 = vmatpush2.bf16.msra.mxu0 %v766
    %1156 = vmatprep.mubr.bf16.mxu0 %v242
    %1157 = vmatmul.mubr.bf16.gmra.mxu0 %v241
    %v1158 = vpop.f32.mrf.mxu0
    %v1159 = vadd.f32 %v1116, %v1158
    %v1160 = vpop.f32.mrf.mxu0
    %v1161 = vadd.f32 %v1118, %v1160
    %v1162 = vpop.f32.mrf.mxu0
    %v1163 = vadd.f32 %v1120, %v1162
    %v1164 = vpop.f32.mrf.mxu0
    %v1165 = vadd.f32 %v1122, %v1164
    %1166 = vdwg.mxu0
    %1167 = vmatprep.subr.bf16.mxu0 0
    %1168 = vmatpush1.bf16.msra.mxu0 0
    %1169 = vmatprep.subr.bf16.mxu0 0
    %1170 = vmatpush1.bf16.msra.mxu0 0
    %1171 = vmatprep.subr.bf16.mxu0 0
    %1172 = vmatpush1.bf16.msra.mxu0 0
    %1173 = vmatprep.subr.bf16.mxu0 0
    %1174 = vmatpush1.bf16.msra.mxu0 0
    %1175 = vmatprep.subr.bf16.mxu0 0
    %1176 = vmatpush1.bf16.msra.mxu0 0
    %1177 = vmatprep.subr.bf16.mxu0 %v807
    %1178 = vmatpush1.bf16.msra.mxu0 %v806
    %1179 = vmatprep.subr.bf16.mxu0 %v803
    %1180 = vmatpush1.bf16.msra.mxu0 %v802
    %1181 = vmatprep.subr.bf16.mxu0 %v799
    %1182 = vmatpush1.bf16.msra.mxu0 %v798
    %1183 = vmatprep.subr.bf16.mxu0 0
    %1184 = vmatpush2.bf16.msra.mxu0 0
    %1185 = vmatprep.subr.bf16.mxu0 0
    %1186 = vmatpush2.bf16.msra.mxu0 0
    %1187 = vmatprep.subr.bf16.mxu0 0
    %1188 = vmatpush2.bf16.msra.mxu0 0
    %1189 = vmatprep.subr.bf16.mxu0 0
    %1190 = vmatpush2.bf16.msra.mxu0 0
    %1191 = vmatprep.subr.bf16.mxu0 0
    %1192 = vmatpush2.bf16.msra.mxu0 0
    %1193 = vmatprep.subr.bf16.mxu0 0
    %1194 = vmatpush2.bf16.msra.mxu0 0
    %1195 = vmatprep.subr.bf16.mxu0 0
    %1196 = vmatpush2.bf16.msra.mxu0 0
    %1197 = vmatprep.subr.bf16.mxu0 0
    %1198 = vmatpush2.bf16.msra.mxu0 0
    %1199 = vmatprep.mubr.bf16.mxu0 0
    %1200 = vmatmul.mubr.bf16.gmra.mxu0 %v950
    %v1201 = vpop.f32.mrf.mxu0
    %v1202 = vadd.f32 %v1159, %v1201
    %v1203 = vpop.f32.mrf.mxu0
    %v1204 = vadd.f32 %v1161, %v1203
    %v1205 = vpop.f32.mrf.mxu0
    %v1206 = vadd.f32 %v1163, %v1205
    %v1207 = vpop.f32.mrf.mxu0
    %v1208 = vadd.f32 %v1165, %v1207
    %1209 = vdwg.mxu0
    %v1210 = vmax.f32 %v1073, 0.0
    %v1211 = vmax.f32 %v1075, 0.0
    %v1212 = vmax.f32 %v1202, 0.0
    %v1213 = vmax.f32 %v1204, 0.0
    %v1214 = vmax.f32 %v1077, 0.0
    %v1215 = vmax.f32 %v1079, 0.0
    %v1216 = vmax.f32 %v1206, 0.0
    %v1217 = vmax.f32 %v1208, 0.0
    %s1218 = scalar_lea.vmem [#allocation7], 1
    %v1219 = vld [vmem:[%s1218] ss:$2 sm:$0xf]
    %v1221 = vlaneseq
    %v1222 = vshrl.u32 %v1221, 7
    %v1223 = vsub.s32 0, %v1222
    %v1224 = vrot.slane %v1219, %v1223
    %v1225 = vlaneseq
    %v1226 = vshrl.u32 %v1225, 7
    %v1227 = vsub.s32 1, %v1226
    %v1228 = vrot.slane %v1219, %v1227
    %v1229 = vlaneseq
    %v1230 = vshrl.u32 %v1229, 7
    %v1231 = vsub.s32 2, %v1230
    %v1232 = vrot.slane %v1219, %v1231
    %v1233 = vlaneseq
    %v1234 = vshrl.u32 %v1233, 7
    %v1235 = vsub.s32 3, %v1234
    %v1236 = vrot.slane %v1219, %v1235
    %1241 = vmatprep.subr.mxu0 0.0
    %1242 = vmatpush1.xpose.msra.mxu0 0.0
    %1243 = vmatprep.subr.mxu0 0.0
    %1244 = vmatpush1.xpose.msra.mxu0 0.0
    %1245 = vmatprep.subr.mxu0 0.0
    %1246 = vmatpush1.xpose.msra.mxu0 0.0
    %1247 = vmatprep.subr.mxu0 0.0
    %1248 = vmatpush1.xpose.msra.mxu0 0.0
    %1249 = vmatprep.subr.mxu0 0.0
    %1250 = vmatpush1.xpose.msra.mxu0 0.0
    %1251 = vmatprep.subr.mxu0 0.0
    %1252 = vmatpush1.xpose.msra.mxu0 0.0
    %1253 = vmatprep.subr.mxu0 0.0
    %1254 = vmatpush1.xpose.msra.mxu0 0.0
    %1255 = vmatprep.subr.mxu0 0.0
    %1256 = vmatpush1.xpose.msra.mxu0 0.0
    %1257 = vmatprep.subr.mxu0 0.0
    %1258 = vmatpush1.xpose.msra.mxu0 0.0
    %1259 = vmatprep.subr.mxu0 0.0
    %1260 = vmatpush1.xpose.msra.mxu0 0.0
    %1261 = vmatprep.subr.mxu0 0.0
    %1262 = vmatpush1.xpose.msra.mxu0 0.0
    %1263 = vmatprep.subr.mxu0 0.0
    %1264 = vmatpush1.xpose.msra.mxu0 0.0
    %1265 = vmatprep.subr.mxu0 0.0
    %1266 = vmatpush1.xpose.msra.mxu0 0.0
    %1267 = vmatprep.subr.mxu0 0.0
    %1268 = vmatpush1.xpose.msra.mxu0 0.0
    %1269 = vmatprep.subr.mxu0 %v1215
    %1270 = vmatpush1.xpose.msra.mxu0 %v1214
    %1271 = vmatprep.subr.mxu0 %v1211
    %1272 = vmatpush1.xpose.msra.mxu0 %v1210
    %1273 = vmatprep.subr.mxu0 0.0
    %1274 = vmatpush2.xpose.msra.mxu0 0.0
    %1275 = vmatprep.subr.mxu0 0.0
    %1276 = vmatpush2.xpose.msra.mxu0 0.0
    %1277 = vmatprep.subr.mxu0 0.0
    %1278 = vmatpush2.xpose.msra.mxu0 0.0
    %1279 = vmatprep.subr.mxu0 0.0
    %1280 = vmatpush2.xpose.msra.mxu0 0.0
    %1281 = vmatprep.subr.mxu0 0.0
    %1282 = vmatpush2.xpose.msra.mxu0 0.0
    %1283 = vmatprep.subr.mxu0 0.0
    %1284 = vmatpush2.xpose.msra.mxu0 0.0
    %1285 = vmatprep.subr.mxu0 0.0
    %1286 = vmatpush2.xpose.msra.mxu0 0.0
    %1287 = vmatprep.subr.mxu0 0.0
    %1288 = vmatpush2.xpose.msra.mxu0 0.0
    %1289 = vmatprep.subr.mxu0 0.0
    %1290 = vmatpush2.xpose.msra.mxu0 0.0
    %1291 = vmatprep.subr.mxu0 0.0
    %1292 = vmatpush2.xpose.msra.mxu0 0.0
    %1293 = vmatprep.subr.mxu0 0.0
    %1294 = vmatpush2.xpose.msra.mxu0 0.0
    %1295 = vmatprep.subr.mxu0 0.0
    %1296 = vmatpush2.xpose.msra.mxu0 0.0
    %1297 = vmatprep.subr.mxu0 0.0
    %1298 = vmatpush2.xpose.msra.mxu0 0.0
    %1299 = vmatprep.subr.mxu0 0.0
    %1300 = vmatpush2.xpose.msra.mxu0 0.0
    %1301 = vmatprep.subr.mxu0 0.0
    %1302 = vmatpush2.xpose.msra.mxu0 0.0
    %1303 = vmatprep.subr.mxu0 0.0
    %1304 = vmatpush2.xpose.msra.mxu0 0.0
    %1305 = vmatprep.mubr.f32.mxu0 %v1228
    %1306 = vmatmul.mubr.f32.gmra.mxu0 %v1224
    %v1307 = vpop.f32.mrf.mxu0
    %v1308 = vadd.f32 0.0, %v1307
    %v1309 = vpop.f32.mrf.mxu0
    %1310 = vdwg.mxu0
    %1311 = vmatprep.subr.mxu0 0.0
    %1312 = vmatpush1.xpose.msra.mxu0 0.0
    %1313 = vmatprep.subr.mxu0 0.0
    %1314 = vmatpush1.xpose.msra.mxu0 0.0
    %1315 = vmatprep.subr.mxu0 0.0
    %1316 = vmatpush1.xpose.msra.mxu0 0.0
    %1317 = vmatprep.subr.mxu0 0.0
    %1318 = vmatpush1.xpose.msra.mxu0 0.0
    %1319 = vmatprep.subr.mxu0 0.0
    %1320 = vmatpush1.xpose.msra.mxu0 0.0
    %1321 = vmatprep.subr.mxu0 0.0
    %1322 = vmatpush1.xpose.msra.mxu0 0.0
    %1323 = vmatprep.subr.mxu0 0.0
    %1324 = vmatpush1.xpose.msra.mxu0 0.0
    %1325 = vmatprep.subr.mxu0 0.0
    %1326 = vmatpush1.xpose.msra.mxu0 0.0
    %1327 = vmatprep.subr.mxu0 0.0
    %1328 = vmatpush1.xpose.msra.mxu0 0.0
    %1329 = vmatprep.subr.mxu0 0.0
    %1330 = vmatpush1.xpose.msra.mxu0 0.0
    %1331 = vmatprep.subr.mxu0 0.0
    %1332 = vmatpush1.xpose.msra.mxu0 0.0
    %1333 = vmatprep.subr.mxu0 0.0
    %1334 = vmatpush1.xpose.msra.mxu0 0.0
    %1335 = vmatprep.subr.mxu0 0.0
    %1336 = vmatpush1.xpose.msra.mxu0 0.0
    %1337 = vmatprep.subr.mxu0 0.0
    %1338 = vmatpush1.xpose.msra.mxu0 0.0
    %1339 = vmatprep.subr.mxu0 %v1217
    %1340 = vmatpush1.xpose.msra.mxu0 %v1216
    %1341 = vmatprep.subr.mxu0 %v1213
    %1342 = vmatpush1.xpose.msra.mxu0 %v1212
    %1343 = vmatprep.subr.mxu0 0.0
    %1344 = vmatpush2.xpose.msra.mxu0 0.0
    %1345 = vmatprep.subr.mxu0 0.0
    %1346 = vmatpush2.xpose.msra.mxu0 0.0
    %1347 = vmatprep.subr.mxu0 0.0
    %1348 = vmatpush2.xpose.msra.mxu0 0.0
    %1349 = vmatprep.subr.mxu0 0.0
    %1350 = vmatpush2.xpose.msra.mxu0 0.0
    %1351 = vmatprep.subr.mxu0 0.0
    %1352 = vmatpush2.xpose.msra.mxu0 0.0
    %1353 = vmatprep.subr.mxu0 0.0
    %1354 = vmatpush2.xpose.msra.mxu0 0.0
    %1355 = vmatprep.subr.mxu0 0.0
    %1356 = vmatpush2.xpose.msra.mxu0 0.0
    %1357 = vmatprep.subr.mxu0 0.0
    %1358 = vmatpush2.xpose.msra.mxu0 0.0
    %1359 = vmatprep.subr.mxu0 0.0
    %1360 = vmatpush2.xpose.msra.mxu0 0.0
    %1361 = vmatprep.subr.mxu0 0.0
    %1362 = vmatpush2.xpose.msra.mxu0 0.0
    %1363 = vmatprep.subr.mxu0 0.0
    %1364 = vmatpush2.xpose.msra.mxu0 0.0
    %1365 = vmatprep.subr.mxu0 0.0
    %1366 = vmatpush2.xpose.msra.mxu0 0.0
    %1367 = vmatprep.subr.mxu0 0.0
    %1368 = vmatpush2.xpose.msra.mxu0 0.0
    %1369 = vmatprep.subr.mxu0 0.0
    %1370 = vmatpush2.xpose.msra.mxu0 0.0
    %1371 = vmatprep.subr.mxu0 0.0
    %1372 = vmatpush2.xpose.msra.mxu0 0.0
    %1373 = vmatprep.subr.mxu0 0.0
    %1374 = vmatpush2.xpose.msra.mxu0 0.0
    %1375 = vmatprep.mubr.f32.mxu0 %v1236
    %1376 = vmatmul.mubr.f32.gmra.mxu0 %v1232
    %v1377 = vpop.f32.mrf.mxu0
    %v1378 = vadd.f32 %v1308, %v1377
    %v1379 = vpop.f32.mrf.mxu0
    %1380 = vdwg.mxu0
    %vm1381 = vcmask 122880
    %1382 = vst.msk [vmem:[#allocation8] sm:$0x1] %vm1381, %v1378
    // Predicated region
    $region26: #{tpu_custom_call.1} parent=1 // pred_check
      _
    $region27: #{tpu_custom_call.1} parent=1 // pred_check_branch
      %1384 = sbr.rel (0) target = $region29
    $region28: #{tpu_custom_call.1} parent=1 // pred_region
      %s1386 = ssub.s32 16, 16
      %1387 = vsyncadd [#allocation4], %s1386
      %s1389 = sshll.u32 [#allocation8], 4
      %s1390 = int_to_ptr.vmem [resolvable:$true] %s1389
      %1392 = dma.vmem_to_hbm [thread:$0]  %s1390, 16, %s3, [#allocation4]
    $region29: #{tpu_custom_call.1} parent=1 // pred_fallthru
      _
    // Predicated region
    $region30: #{tpu_custom_call.1} parent=1 // pred_check
      _
    $region31: #{tpu_custom_call.1} parent=1 // pred_check_branch
      %1394 = sbr.rel (0) target = $region33
    $region32: #{tpu_custom_call.1} parent=1 // pred_region
      %1395 = dma.done [#allocation4], 16
    $region33: #{tpu_custom_call.1} parent=1 // pred_fallthru
      _
    %1396 = vsyncpa [#allocation3], 1
    %1397 = vsyncpa [#allocation6], 1
    %1398 = vsyncpa [#allocation4], 1

</llo_original>
